<compile_context>
chip_gen: v7x
topology: tpu7x:2x2x1
jax: 0.10.0
libtpu: 0.0.40
codegen_flags: <defaults>
</compile_context>

<pallas_src>
import functools

import jax
import jax.numpy as jnp
from jax.experimental import pallas as pl
from jax.experimental.pallas import tpu as pltpu


def _round_up(x, m):
    return (x + m - 1) // m * m


def _vmem_limit_bytes():
    """Generation-aware scoped-VMEM cap: ~64 MiB on v5e/v6e (128 MiB physical),
    ~40 MiB on v7x (64 MiB physical); conservative 32 MiB if the query fails."""
    default = 32 * 1024 * 1024
    try:
        cap = int(pltpu.get_tpu_info().vmem_capacity_bytes)
    except Exception:
        return default
    return max(default, min(64 * 1024 * 1024, (cap * 5) // 8))


# ---------------------------------------------------------------------------
# Kernels
# ---------------------------------------------------------------------------

def _linear_kernel_single_k(z_ref, w_ref, b_ref, o_ref):
    """K fits in one block: no accumulator scratch, no pl.when scaffolding.
    z is cast to the weight's compute dtype in-register (bf16 feeds the MXU by
    default; a no-op for f32); accumulate in f32; bias add + store in f32."""
    z = z_ref[...].astype(w_ref.dtype)
    o_ref[...] = (
        jnp.dot(z, w_ref[...], preferred_element_type=jnp.float32) + b_ref[...]
    ).astype(o_ref.dtype)


def _linear_kernel_split_k(z_ref, w_ref, b_ref, o_ref, acc_ref):
    """K split across the innermost ('arbitrary') grid axis with an f32 VMEM
    accumulator; the first K step assigns (no zero-init read-modify-write)."""
    k = pl.program_id(2)
    z = z_ref[...].astype(w_ref.dtype)
    part = jnp.dot(z, w_ref[...], preferred_element_type=jnp.float32)

    @pl.when(k == 0)
    def _():
        acc_ref[...] = part

    @pl.when(k > 0)
    def _():
        acc_ref[...] += part

    @pl.when(k == pl.num_programs(2) - 1)
    def _():
        o_ref[...] = (acc_ref[...] + b_ref[...]).astype(o_ref.dtype)


# ---------------------------------------------------------------------------
# One-time parameter prep (init), then a thin jitted forward (hot path)
# ---------------------------------------------------------------------------

def prepare_decoder_params(weight, bias, *, compute_dtype=jnp.bfloat16, tk=512):
    """One-time layout/dtype prep — run at init, never on the hot path.

    weight: (output_dim, latent_dim)   PyTorch nn.Linear layout
    bias:   (output_dim,)
    Returns:
      w_p: (k_pad, n_pad)  pre-transposed, zero-padded, compute-dtype weight
      b_p: (1, n_pad)      zero-padded f32 bias
    n_pad is a multiple of 128 so output stores are lane-dense.  K is left
    unpadded when it fits a single K block, otherwise padded to a tk multiple.
    """
    w_t = jnp.asarray(weight, jnp.float32).T            # (latent, output)
    k_dim, n_dim = w_t.shape
    n_pad = _round_up(max(n_dim, 128), 128)
    if k_dim <= tk:
        k_pad = k_dim                                    # single K block
    else:
        tk = _round_up(tk, 128)
        k_pad = _round_up(k_dim, tk)
    w_p = jnp.pad(w_t, ((0, k_pad - k_dim), (0, n_pad - n_dim))).astype(compute_dtype)
    b_p = jnp.pad(jnp.asarray(bias, jnp.float32), (0, n_pad - n_dim)).reshape(1, n_pad)
    return w_p, b_p


@functools.partial(
    jax.jit, static_argnames=("output_dim", "tm", "tn", "tk", "use_pallas"))
def stub_decoder_forward(z, w_p, b_p, *, output_dim, tm=256, tn=512, tk=512,
                         use_pallas=None):
    """
    z:   (batch, latent_dim) activations; cast to w_p.dtype inside the kernel.
    w_p: (k_pad, n_pad)      from prepare_decoder_params
    b_p: (1, n_pad)          from prepare_decoder_params
    Returns (batch, output_dim) in z.dtype — matches nn.Linear: z @ W.T + b.
    """
    batch, k_dim = z.shape
    k_pad, n_pad = w_p.shape
    assert b_p.shape == (1, n_pad)
    assert k_pad >= k_dim, "params must come from prepare_decoder_params"
    out_dtype = z.dtype

    # Only z's K ever needs a per-call pad, and only if prepare() padded K
    # (latent_dim > tk at init).  Padded W rows are zero, so this is exact.
    if k_pad != k_dim:
        z = jnp.pad(z, ((0, 0), (0, k_pad - k_dim)))

    if use_pallas is None:
        # Tiny problems are pure launch/DMA overhead in a custom kernel.
        # TODO(synk): for real serving, batch requests so batch >= 128.
        use_pallas = batch >= 8 and k_pad * n_pad >= 128 * 128

    if not use_pallas:
        out = jnp.dot(z.astype(w_p.dtype), w_p,
                      preferred_element_type=jnp.float32) + b_p
        out = out.astype(out_dtype)
        return out[:, :output_dim] if output_dim != n_pad else out

    # --- M: no per-call padding; Pallas masks the ragged boundary block. ---
    tm = min(tm, batch)                 # block == full dim when batch < tm
    grid_m = pl.cdiv(batch, tm)

    # --- N: padded at init, so every output store stays lane-dense. ---
    tn = min(tn, n_pad)
    grid_n = pl.cdiv(n_pad, tn)
    if grid_m == 1 and grid_n == 1 and n_pad >= 256:
        # Give v7x's two TensorCores >= 2 "parallel" blocks (no-op on v5e/v6e).
        tn = _round_up(pl.cdiv(n_pad, 2), 128)
        grid_n = pl.cdiv(n_pad, tn)

    vmem_limit = _vmem_limit_bytes()
    single_k = (k_pad <= tk) or (k_pad % 128 != 0)

    if single_k:
        out_p = pl.pallas_call(
            _linear_kernel_single_k,
            out_shape=jax.ShapeDtypeStruct((batch, n_pad), out_dtype),
            grid=(grid_m, grid_n),
            in_specs=[
                pl.BlockSpec((tm, k_pad), lambda i, j: (i, 0)),   # z (whole K)
                pl.BlockSpec((k_pad, tn), lambda i, j: (0, j)),   # W (whole K)
                pl.BlockSpec((1, tn), lambda i, j: (0, j)),       # bias
            ],
            out_specs=pl.BlockSpec((tm, tn), lambda i, j: (i, j)),
            compiler_params=pltpu.CompilerParams(
                dimension_semantics=("parallel", "parallel"),
                vmem_limit_bytes=vmem_limit,
            ),
        )(z, w_p, b_p)
    else:
        # Split K: pick a 128-multiple tk that divides k_pad (ragged K would
        # mix garbage into the accumulator, unlike ragged M/N).
        tk = min(tk, k_pad)
        tk -= tk % 128
        while k_pad % tk:
            tk -= 128
        out_p = pl.pallas_call(
            _linear_kernel_split_k,
            out_shape=jax.ShapeDtypeStruct((batch, n_pad), out_dtype),
            grid=(grid_m, grid_n, k_pad // tk),
            in_specs=[
                pl.BlockSpec((tm, tk), lambda i, j, k: (i, k)),   # z tile
                pl.BlockSpec((tk, tn), lambda i, j, k: (k, j)),   # W tile
                pl.BlockSpec((1, tn), lambda i, j, k: (0, j)),    # bias tile
            ],
            out_specs=pl.BlockSpec((tm, tn), lambda i, j, k: (i, j)),
            scratch_shapes=[pltpu.VMEM((tm, tn), jnp.float32)],
            compiler_params=pltpu.CompilerParams(
                dimension_semantics=("parallel", "parallel", "arbitrary"),
                vmem_limit_bytes=vmem_limit,
            ),
        )(z, w_p, b_p)

    # Padded N columns are exact zeros (zero weight/bias cols); slice only
    # when output_dim is not already a multiple of 128.
    return out_p[:, :output_dim] if output_dim != n_pad else out_p


if __name__ == "__main__":
    latent_dim = 64
    output_dim = 64
    batch = 2

    key = jax.random.PRNGKey(0)
    k_z, k_w, k_b = jax.random.split(key, 3)

    # Deterministic synthetic params in PyTorch nn.Linear layout.
    z = jax.random.normal(k_z, (batch, latent_dim), dtype=jnp.float32)
    weight = jax.random.normal(k_w, (output_dim, latent_dim), dtype=jnp.float32) * 0.1
    bias = jax.random.normal(k_b, (output_dim,), dtype=jnp.float32) * 0.1

    # Reference: nn.Linear forward semantics.
    ref = z @ weight.T + bias

    # Default (bf16 operands, f32 accumulation) — force the Pallas path so the
    # kernel itself is exercised even at this tiny stub size.
    w_p, b_p = prepare_decoder_params(weight, bias)              # bf16 by default
    out = stub_decoder_forward(z, w_p, b_p, output_dim=output_dim, use_pallas=True)
    out = jax.block_until_ready(out)
    assert out.shape == (batch, output_dim)
    assert jnp.allclose(out, ref, atol=3e-2, rtol=3e-2), \
        float(jnp.max(jnp.abs(out - ref)))

    # f32 operands: bit-for-bit-tight check of the same kernel.
    w32, b32 = prepare_decoder_params(weight, bias, compute_dtype=jnp.float32)
    out32 = jax.block_until_ready(
        stub_decoder_forward(z, w32, b32, output_dim=output_dim, use_pallas=True))
    assert jnp.allclose(out32, ref, atol=1e-5, rtol=1e-5), \
        float(jnp.max(jnp.abs(out32 - ref)))

    # Auto dispatch (tiny batch -> XLA fallback) must also match.
    out_auto = jax.block_until_ready(
        stub_decoder_forward(z, w_p, b_p, output_dim=output_dim))
    assert jnp.allclose(out_auto, ref, atol=3e-2, rtol=3e-2)

    print("KERNEL_OK")
</pallas_src>

<mosaic_0001>
module attributes {stable_mosaic.version = 11 : i64} {
  func.func @_linear_kernel_single_k(%arg0: i32, %arg1: i32, %arg2: memref<2x64xf32, #tpu.memory_space<vmem>>, %arg3: memref<64x128xbf16, #tpu.memory_space<vmem>>, %arg4: memref<1x128xf32, #tpu.memory_space<vmem>>, %arg5: memref<2x128xf32, #tpu.memory_space<vmem>>) attributes {dimension_semantics = [#tpu.dimension_semantics<parallel>, #tpu.dimension_semantics<parallel>], iteration_bounds = array<i64: 1, 1>, scalar_prefetch = 0 : i64, scratch_operands = 0 : i64, tpu.core_type = #tpu.core_type<tc>, window_params = [{transform_indices = @transform_0, window_bounds = array<i64: 2, 64>}, {transform_indices = @transform_1, window_bounds = array<i64: 64, 128>}, {transform_indices = @transform_2, window_bounds = array<i64: 1, 128>}, {transform_indices = @transform_3, window_bounds = array<i64: 2, 128>}]} {
    %c0 = arith.constant 0 : index
    %c0_0 = arith.constant 0 : index
    %0 = vector.load %arg2[%c0, %c0_0] : memref<2x64xf32, #tpu.memory_space<vmem>>, vector<2x64xf32>
    %1 = arith.truncf %0 : vector<2x64xf32> to vector<2x64xbf16>
    %c0_1 = arith.constant 0 : index
    %c0_2 = arith.constant 0 : index
    %2 = vector.load %arg3[%c0_1, %c0_2] : memref<64x128xbf16, #tpu.memory_space<vmem>>, vector<64x128xbf16>
    %cst = arith.constant dense<0.000000e+00> : vector<2x128xf32>
    %3 = tpu.matmul %1, %2, %cst {dimension_numbers = #tpu.dot_dimension_numbers<[1], [0], [0], [1], [0, 0, 1, 1], [], []>} : vector<2x64xbf16>, vector<64x128xbf16>, vector<2x128xf32> -> vector<2x128xf32>
    %c0_3 = arith.constant 0 : index
    %c0_4 = arith.constant 0 : index
    %4 = vector.load %arg4[%c0_3, %c0_4] : memref<1x128xf32, #tpu.memory_space<vmem>>, vector<1x128xf32>
    %5 = vector.broadcast %4 : vector<1x128xf32> to vector<2x128xf32>
    %6 = arith.addf %3, %5 : vector<2x128xf32>
    %c0_5 = arith.constant 0 : index
    %c0_6 = arith.constant 0 : index
    %7 = vector.load %arg5[%c0_5, %c0_6] : memref<2x128xf32, #tpu.memory_space<vmem>>, vector<2x128xf32>
    tpu.vector_store %arg5[%c0_5, %c0_6], %6 {strides = array<i32>} : memref<2x128xf32, #tpu.memory_space<vmem>>, vector<2x128xf32>,
    return
  }
  func.func @transform_0(%arg0: i32, %arg1: i32) -> (i32, i32) {
    %c0_i32 = arith.constant 0 : i32
    %c0_i32_0 = arith.constant 0 : i32
    return %arg0, %c0_i32 : i32, i32
  }
  func.func @transform_1(%arg0: i32, %arg1: i32) -> (i32, i32) {
    %c0_i32 = arith.constant 0 : i32
    %c0_i32_0 = arith.constant 0 : i32
    return %c0_i32, %arg1 : i32, i32
  }
  func.func @transform_2(%arg0: i32, %arg1: i32) -> (i32, i32) {
    %c0_i32 = arith.constant 0 : i32
    %c0_i32_0 = arith.constant 0 : i32
    return %c0_i32, %arg1 : i32, i32
  }
  func.func @transform_3(%arg0: i32, %arg1: i32) -> (i32, i32) {
    %c0_i32 = arith.constant 0 : i32
    return %arg0, %arg1 : i32, i32
  }
}

</mosaic_0001>

<llo_original>
// kernel: stub_decoder_forward.1
$region0: #{stub_decoder_forward.1}
  #allocation0 [shape = 'u32[]', space=smem, size = 0x4, offset = 0x4, fixed_abs, tag = 'smem constant byte address 0x4 - core index']
  #allocation1 [shape = 'u32[144,128]{1,0:T(1,128)}', space=vmem, size = 0x12000, scoped, tag = 'internal scratch']
  %s0 = inlined_call_operand.hbm [shape: f32[2,64], index: 0, kind: input, shape index: {}]
  %s1 = inlined_call_operand.hbm [shape: bf16[64,128], index: 1, kind: input, shape index: {}]
  %s2 = inlined_call_operand.vmem [shape: f32[1,128], index: 2, kind: input, shape index: {}]
  %s3 = inlined_call_operand.hbm [shape: f32[2,128], index: 3, kind: output, shape index: {}]
  %s4 = sld [smem:[#allocation0]]
  $region30: #{stub_decoder_forward.1} parent=0
    _
  %s6 = ssub.s32 1, %s4
  %s7 = scalar_select 0, %s6, %s4
  $region1: #{stub_decoder_forward.1} parent=0
    #allocation2 [shape = 'u8[1024]{0}', space=vmem, size = 0x400, scoped, tag = 'input window, operand 0, single buffered']
    #allocation3 [shape = 's32[1]{0}', space=sflag, size = 0x4, scoped, tag = 'scoped memory for stub_decoder_forward.1']
    #allocation4 [shape = 's32[1]{0}', space=sflag, size = 0x4, scoped, tag = 'scoped memory for stub_decoder_forward.1']
    #allocation5 [shape = 'u8[16384]{0}', space=vmem, size = 0x4000, scoped, tag = 'input window, operand 1, single buffered']
    #allocation6 [shape = 's32[1]{0}', space=sflag, size = 0x4, scoped, tag = 'scoped memory for stub_decoder_forward.1']
    #allocation7 [shape = 'u8[1024]{0}', space=vmem, size = 0x400, scoped, tag = 'output window, operand 0, single buffered']
    %8 = vsyncpa [#allocation3], 0
    %9 = vsyncpa [#allocation6], 0
    %10 = vsyncpa [#allocation4], 0
    // Predicated region
    $region2: #{stub_decoder_forward.1} parent=1 // pred_check
      _
    $region3: #{stub_decoder_forward.1} parent=1 // pred_check_branch
      %12 = sbr.rel (0) target = $region5
    $region4: #{stub_decoder_forward.1} parent=1 // pred_region
      %s14 = ssub.s32 32, 32
      %15 = vsyncadd [#allocation3], %s14
      %s17 = sshll.u32 [#allocation2], 4
      %s18 = int_to_ptr.vmem [resolvable:$true] %s17
      %20 = dma.hbm_to_vmem [thread:$0]  %s0, 32, %s18, [#allocation3]
    $region5: #{stub_decoder_forward.1} parent=1 // pred_fallthru
      _
    // Predicated region
    $region6: #{stub_decoder_forward.1} parent=1 // pred_check
      _
    $region7: #{stub_decoder_forward.1} parent=1 // pred_check_branch
      %22 = sbr.rel (0) target = $region9
    $region8: #{stub_decoder_forward.1} parent=1 // pred_region
      %s24 = ssub.s32 512, 512
      %25 = vsyncadd [#allocation6], %s24
      %s26 = sshll.u32 [#allocation5], 4
      %s27 = int_to_ptr.vmem [resolvable:$true] %s26
      %32 = dma.hbm_to_vmem [thread:$0]  %s1, 512, %s27, [#allocation6], 64, 64, 4
    $region9: #{stub_decoder_forward.1} parent=1 // pred_fallthru
      _
    // Predicated region
    $region10: #{stub_decoder_forward.1} parent=1 // pred_check
      _
    $region11: #{stub_decoder_forward.1} parent=1 // pred_check_branch
      %34 = sbr.rel (0) target = $region13
    $region12: #{stub_decoder_forward.1} parent=1 // pred_region
      _
    $region13: #{stub_decoder_forward.1} parent=1 // pred_fallthru
      _
    // Predicated region
    $region14: #{stub_decoder_forward.1} parent=1 // pred_check
      _
    $region15: #{stub_decoder_forward.1} parent=1 // pred_check_branch
      %36 = sbr.rel (0) target = $region17
    $region16: #{stub_decoder_forward.1} parent=1 // pred_region
      %37 = dma.done [#allocation3], 32
    $region17: #{stub_decoder_forward.1} parent=1 // pred_fallthru
      _
    // Predicated region
    $region18: #{stub_decoder_forward.1} parent=1 // pred_check
      _
    $region19: #{stub_decoder_forward.1} parent=1 // pred_check_branch
      %39 = sbr.rel (0) target = $region21
    $region20: #{stub_decoder_forward.1} parent=1 // pred_region
      %40 = dma.done [#allocation6], 512
    $region21: #{stub_decoder_forward.1} parent=1 // pred_fallthru
      _
    %v42 = vld [vmem:[#allocation2] sm:$0x3]
    %v43 = vpack.c.bf16 %v42, %v42
    %v44 = vld [vmem:[#allocation5] sm:$0xf]
    %v45 = vld [vmem:[#allocation5 + $0x4] sm:$0xf]
    %v46 = vld [vmem:[#allocation5 + $0x8] sm:$0xf]
    %v47 = vld [vmem:[#allocation5 + $0xc] sm:$0xf]
    %v48 = vld [vmem:[#allocation5 + $0x10] sm:$0xf]
    %v49 = vld [vmem:[#allocation5 + $0x14] sm:$0xf]
    %v50 = vld [vmem:[#allocation5 + $0x18] sm:$0xf]
    %v51 = vld [vmem:[#allocation5 + $0x1c] sm:$0xf]
    %v52 = vld [vmem:[%s2] sm:$0x1]
    %v54 = vlaneseq
    %v55 = vshrl.u32 %v54, 7
    %v56 = vsub.s32 0, %v55
    %v57 = vrot.slane %v52, %v56
    %v67 = vunpack.c.l.b16 %v44
    %v68 = vunpack.c.l.b16 %v45
    %v69 = vunpack.c.l.b16 %v46
    %v70 = vunpack.c.l.b16 %v47
    %v71 = vunpack.c.l.b16 %v48
    %v72 = vunpack.c.l.b16 %v49
    %v73 = vunpack.c.l.b16 %v50
    %v74 = vunpack.c.l.b16 %v51
    %v75 = vpack.c.b16 %v68, %v67
    %v76 = vpack.c.b16 %v70, %v69
    %v77 = vpack.c.b16 %v72, %v71
    %v78 = vpack.c.b16 %v74, %v73
    %vm83 = vcmask 523264
    %v85 = vsel %vm83, %v43, 0
    %87 = vmatprep.subr.bf16.mxu0 0
    %88 = vmatpush1.bf16.msra.mxu0 %v75
    %89 = vmatprep.subr.bf16.mxu0 0
    %90 = vmatpush1.bf16.msra.mxu0 %v76
    %91 = vmatprep.subr.bf16.mxu0 0
    %92 = vmatpush1.bf16.msra.mxu0 %v77
    %93 = vmatprep.subr.bf16.mxu0 0
    %94 = vmatpush1.bf16.msra.mxu0 %v78
    %95 = vmatprep.subr.bf16.mxu0 0
    %96 = vmatpush1.bf16.msra.mxu0 0
    %97 = vmatprep.subr.bf16.mxu0 0
    %98 = vmatpush1.bf16.msra.mxu0 0
    %99 = vmatprep.subr.bf16.mxu0 0
    %100 = vmatpush1.bf16.msra.mxu0 0
    %101 = vmatprep.subr.bf16.mxu0 0
    %102 = vmatpush1.bf16.msra.mxu0 0
    %103 = vmatprep.subr.bf16.mxu0 0
    %104 = vmatpush1.bf16.msra.mxu0 0
    %105 = vmatprep.subr.bf16.mxu0 0
    %106 = vmatpush1.bf16.msra.mxu0 0
    %107 = vmatprep.subr.bf16.mxu0 0
    %108 = vmatpush1.bf16.msra.mxu0 0
    %109 = vmatprep.subr.bf16.mxu0 0
    %110 = vmatpush1.bf16.msra.mxu0 0
    %111 = vmatprep.subr.bf16.mxu0 0
    %112 = vmatpush1.bf16.msra.mxu0 0
    %113 = vmatprep.subr.bf16.mxu0 0
    %114 = vmatpush1.bf16.msra.mxu0 0
    %115 = vmatprep.subr.bf16.mxu0 0
    %116 = vmatpush1.bf16.msra.mxu0 0
    %117 = vmatprep.subr.bf16.mxu0 0
    %118 = vmatpush1.bf16.msra.mxu0 0
    %119 = vmatprep.mubr.bf16.mxu0 0
    %120 = vmatmul.mubr.bf16.gmra.mrb[0].mxu0 %v85
    %v121 = vpop.f32.mrb[0].mxu0
    %v122 = vadd.f32 %v57, %v121
    %v123 = vpop.f32.mrb[0].mxu0
    %v124 = vpop.f32.mrb[0].mxu0
    %v125 = vpop.f32.mrb[0].mxu0
    %126 = vdwg.mxu0
    %127 = vst [vmem:[#allocation7] sm:$0x3] %v122
    // Predicated region
    $region22: #{stub_decoder_forward.1} parent=1 // pred_check
      _
    $region23: #{stub_decoder_forward.1} parent=1 // pred_check_branch
      %129 = sbr.rel (0) target = $region25
    $region24: #{stub_decoder_forward.1} parent=1 // pred_region
      %s131 = ssub.s32 32, 32
      %132 = vsyncadd [#allocation4], %s131
      %s134 = sshll.u32 [#allocation7], 4
      %s135 = int_to_ptr.vmem [resolvable:$true] %s134
      %137 = dma.vmem_to_hbm [thread:$0]  %s135, 32, %s3, [#allocation4]
    $region25: #{stub_decoder_forward.1} parent=1 // pred_fallthru
      _
    // Predicated region
    $region26: #{stub_decoder_forward.1} parent=1 // pred_check
      _
    $region27: #{stub_decoder_forward.1} parent=1 // pred_check_branch
      %139 = sbr.rel (0) target = $region29
    $region28: #{stub_decoder_forward.1} parent=1 // pred_region
      %140 = dma.done [#allocation4], 32
    $region29: #{stub_decoder_forward.1} parent=1 // pred_fallthru
      _
    %141 = vsyncpa [#allocation3], 1
    %142 = vsyncpa [#allocation6], 1
    %143 = vsyncpa [#allocation4], 1

</llo_original>
